<compile_context>
chip_gen: v7x
topology: tpu7x:2x2x1
jax: 0.10.0
libtpu: 0.0.40
codegen_flags: <defaults>
</compile_context>

<pallas_src>
import functools

import jax
import jax.numpy as jnp
from jax.experimental import pallas as pl
from jax.experimental.pallas import tpu as pltpu


_FUSED_BLOCK_BYTES = 4 * 1024 * 1024   # f32-equivalent budget for one resident (N, ct, HW) slab
_STREAM_BLOCK_BYTES = 4 * 1024 * 1024  # budget for one (ct, lt) x block in the 2-pass path


def _vmem_limit_bytes() -> int:
    """Explicit scoped-VMEM limit: ~75% of physical VMEM, capped at 100 MiB."""
    try:
        cap = pltpu.get_tpu_info().vmem_capacity_bytes
    except Exception:
        cap = 64 * 1024 * 1024  # v7x physical size -> 48 MiB limit, safe everywhere
    return int(min(cap * 3 // 4, 100 * 1024 * 1024))


def _sublane_pack(dtype) -> int:
    """Minimum sublane multiple for a packed dtype (8/f32, 16/bf16, 32/int8)."""
    return max(8, 32 // jnp.dtype(dtype).itemsize)


def _channel_tile_candidates(c: int, pack: int):
    """Divisors of C that are sublane-pack multiples (plus full C), descending."""
    cands = [d for d in range(c, 0, -1) if c % d == 0 and (d % pack == 0 or d == c)]
    return cands or [c]


def _pick_streaming_tiles(c: int, hw: int, itemsize: int, pack: int, budget: int):
    """Joint (ct, lt) pick for the 2-pass path: prefer full-hw contiguous blocks."""
    cands = _channel_tile_candidates(c, pack)
    fitting = [ct for ct in cands if ct * hw * itemsize <= budget]
    if fitting:
        multi = [ct for ct in fitting if c // ct >= 2]   # keep both v7x cores fed
        ct, lt = (multi[0] if multi else fitting[0]), hw
    else:
        ct = cands[-1]                                   # smallest legal channel tile
        max_lanes = max(128, (budget // (ct * itemsize)) // 128 * 128)
        lt = min(max_lanes, hw)
    chunked = (lt % 128 == 0)   # lane-chunked pure-VALU accumulation possible
    ragged = (hw % lt != 0)     # last lane block is partial -> mask in stats pass
    return ct, lt, chunked, ragged


# --------------------------- fused single-pass kernel ---------------------------


def _bn2d_fused_kernel(x_ref, w_ref, b_ref, y_ref, *, nhw: int, eps: float):
    # Whole (N, ct, HW) slab resident in VMEM: stats + normalize in one pass.
    x = x_ref[...].astype(jnp.float32)                            # (N, ct, HW)
    ct = x.shape[1]
    # Lane reduce first, then the cheap reduce over the batch axis.
    s = jnp.sum(jnp.sum(x, axis=2, keepdims=True), axis=0, keepdims=True)
    mean = s * jnp.float32(1.0 / nhw)                             # (1, ct, 1)
    d = x - mean
    den = max(nhw - 1, 1)  # torch.var default (unbiased), as the module code does
    var = jnp.sum(jnp.sum(d * d, axis=2, keepdims=True), axis=0,
                  keepdims=True) * jnp.float32(1.0 / den)
    var = jnp.maximum(var, 0.0)
    inv_std = jax.lax.rsqrt(var + jnp.float32(eps))
    w = w_ref[...].astype(jnp.float32).reshape(1, ct, 1)
    b = b_ref[...].astype(jnp.float32).reshape(1, ct, 1)
    scale = w * inv_std
    shift = b - mean * scale
    y_ref[...] = (x * scale + shift).astype(y_ref.dtype)


# --------------------------- two-pass streaming kernels --------------------------


def _bn2d_stats_kernel(x_ref, w_ref, b_ref, scale_ref, shift_ref,
                       sum_ref, sumsq_ref, *, nhw: int, eps: float, hw: int,
                       lane_tile: int, chunked: bool, ragged: bool):
    # x_ref: (ct, lt); w/b/scale/shift: (ct, 1); sum/sumsq scratch: (ct, 128|1).
    n_id = pl.program_id(1)
    l_id = pl.program_id(2)

    @pl.when(jnp.logical_and(n_id == 0, l_id == 0))
    def _init():
        sum_ref[...] = jnp.zeros_like(sum_ref)
        sumsq_ref[...] = jnp.zeros_like(sumsq_ref)

    ct = sum_ref.shape[0]

    if chunked:
        # Pure vld + VALU inner loop into lane-wide (ct, 128) partials; the
        # cross-lane reduce happens once, in the finalize branch.
        nchunks = lane_tile // 128

        def body(j, carry):
            s, ss = carry
            off = pl.multiple_of(j * 128, 128)
            blk = x_ref[:, pl.ds(off, 128)].astype(jnp.float32)     # (ct, 128)
            if ragged:  # static flag: zero the padded tail of the last lane block
                lane = jax.lax.broadcasted_iota(jnp.int32, blk.shape, 1)
                blk = jnp.where(l_id * lane_tile + off + lane < hw, blk, 0.0)
            return s + blk, ss + blk * blk

        zeros = jnp.zeros((ct, 128), jnp.float32)
        s, ss = jax.lax.fori_loop(0, nchunks, body, (zeros, zeros),
                                  unroll=(nchunks <= 8))
        sum_ref[...] += s
        sumsq_ref[...] += ss
    else:
        # lane_tile == hw and hw is not a multiple of 128: whole-block reduce.
        x = x_ref[...].astype(jnp.float32)
        sum_ref[...] += jnp.sum(x, axis=1, keepdims=True)
        sumsq_ref[...] += jnp.sum(x * x, axis=1, keepdims=True)

    is_last = jnp.logical_and(n_id == pl.num_programs(1) - 1,
                              l_id == pl.num_programs(2) - 1)

    @pl.when(is_last)
    def _finalize():
        s = jnp.sum(sum_ref[...], axis=1, keepdims=True)      # (ct, 1)
        ss = jnp.sum(sumsq_ref[...], axis=1, keepdims=True)   # (ct, 1)
        mean = s * jnp.float32(1.0 / nhw)
        den = max(nhw - 1, 1)  # torch.var default (unbiased), as the module code does
        var = (ss - s * mean) * jnp.float32(1.0 / den)
        var = jnp.maximum(var, 0.0)   # guard E[x^2]-E[x]^2 cancellation
        inv_std = jax.lax.rsqrt(var + jnp.float32(eps))
        scale = w_ref[...].astype(jnp.float32) * inv_std
        scale_ref[...] = scale
        shift_ref[...] = b_ref[...].astype(jnp.float32) - mean * scale


def _bn2d_norm_kernel(x_ref, scale_ref, shift_ref, y_ref):
    # Fused affine normalize: one multiply + one add per element.
    x = x_ref[...].astype(jnp.float32)                            # (ct, lt)
    y_ref[...] = (x * scale_ref[...] + shift_ref[...]).astype(y_ref.dtype)


# ------------------------------------ wrapper ------------------------------------


def batchnorm2d_forward(x, weight, bias, eps: float = 1e-5, *,
                        max_fused_block_bytes: int = _FUSED_BLOCK_BYTES,
                        max_block_bytes: int = _STREAM_BLOCK_BYTES):
    """x: (N, C, H, W); weight/bias: (C,). Returns (N, C, H, W)."""
    N, C, H, W = x.shape
    hw = H * W
    nhw = N * hw
    itemsize = jnp.dtype(x.dtype).itemsize
    pack = _sublane_pack(x.dtype)
    vmem_limit = _vmem_limit_bytes()

    # Zero-copy views only (no HBM transposes): NCHW -> (N, C, H*W).
    x_r = x.reshape(N, C, hw)
    w_c = weight.reshape(C, 1).astype(jnp.float32)
    b_c = bias.reshape(C, 1).astype(jnp.float32)

    cands = _channel_tile_candidates(C, pack)

    # ---------------- Fused single-pass path (1 read + 1 write). ----------------
    # Budget accounted in f32 bytes (the in-kernel temporaries are f32).
    fitting = [ct for ct in cands if N * ct * hw * 4 <= max_fused_block_bytes]
    if fitting:
        multi = [ct for ct in fitting if C // ct >= 2]   # feed both v7x TensorCores
        ct = multi[0] if multi else fitting[0]
        slab_spec = pl.BlockSpec((N, ct, hw), lambda c: (0, c, 0))
        cvec_spec = pl.BlockSpec((ct, 1), lambda c: (c, 0))
        y_r = pl.pallas_call(
            functools.partial(_bn2d_fused_kernel, nhw=nhw, eps=eps),
            out_shape=jax.ShapeDtypeStruct((N, C, hw), x.dtype),
            grid_spec=pltpu.PrefetchScalarGridSpec(
                num_scalar_prefetch=0,
                grid=(C // ct,),
                in_specs=[slab_spec, cvec_spec, cvec_spec],
                out_specs=slab_spec),
            compiler_params=pltpu.CompilerParams(
                dimension_semantics=("parallel",),
                vmem_limit_bytes=vmem_limit),
        )(x_r, w_c, b_c)
        return y_r.reshape(N, C, H, W)

    # ---------------- Two-pass streaming path (2 reads + 1 write). ----------------
    ct, lt, chunked, ragged = _pick_streaming_tiles(C, hw, itemsize, pack,
                                                    max_block_bytes)
    grid = (C // ct, N, pl.cdiv(hw, lt))
    acc_lanes = 128 if chunked else 1

    x_spec = pl.BlockSpec((None, ct, lt), lambda c, n, l: (n, c, l))
    cvec_spec = pl.BlockSpec((ct, 1), lambda c, n, l: (c, 0))

    # Pass 1: per-channel fused scale/shift from batch statistics.
    scale, shift = pl.pallas_call(
        functools.partial(_bn2d_stats_kernel, nhw=nhw, eps=eps, hw=hw,
                          lane_tile=lt, chunked=chunked, ragged=ragged),
        out_shape=(jax.ShapeDtypeStruct((C, 1), jnp.float32),
                   jax.ShapeDtypeStruct((C, 1), jnp.float32)),
        grid_spec=pltpu.PrefetchScalarGridSpec(
            num_scalar_prefetch=0,
            grid=grid,
            in_specs=[x_spec, cvec_spec, cvec_spec],
            out_specs=(cvec_spec, cvec_spec),
            scratch_shapes=[pltpu.VMEM((ct, acc_lanes), jnp.float32),
                            pltpu.VMEM((ct, acc_lanes), jnp.float32)]),
        compiler_params=pltpu.CompilerParams(
            dimension_semantics=("parallel", "arbitrary", "arbitrary"),
            vmem_limit_bytes=vmem_limit),
    )(x_r, w_c, b_c)

    # Pass 2: fully parallel streaming normalize.
    y_r = pl.pallas_call(
        _bn2d_norm_kernel,
        out_shape=jax.ShapeDtypeStruct((N, C, hw), x.dtype),
        grid_spec=pltpu.PrefetchScalarGridSpec(
            num_scalar_prefetch=0,
            grid=grid,
            in_specs=[x_spec, cvec_spec, cvec_spec],
            out_specs=x_spec),
        compiler_params=pltpu.CompilerParams(
            dimension_semantics=("parallel", "parallel", "parallel"),
            vmem_limit_bytes=vmem_limit),
    )(x_r, scale, shift)

    return y_r.reshape(N, C, H, W)


def batchnorm2d_reference(x, weight, bias, eps: float = 1e-5):
    # Pure-JAX reference of the PyTorch forward (training mode, unbiased var).
    mean = jnp.mean(x, axis=(0, 2, 3), keepdims=True)
    n = x.shape[0] * x.shape[2] * x.shape[3]
    var = jnp.sum((x - mean) ** 2, axis=(0, 2, 3), keepdims=True) / (n - 1)
    w = weight.reshape(1, -1, 1, 1)
    b = bias.reshape(1, -1, 1, 1)
    return (x - mean) / jnp.sqrt(var + eps) * w + b


if __name__ == "__main__":
    root = jax.random.PRNGKey(0)

    def make_inputs(shape, seed):
        n, c, h, w = shape
        kx, kw, kb = jax.random.split(jax.random.fold_in(root, seed), 3)
        x = jax.random.normal(kx, (n, c, h, w), dtype=jnp.float32)
        weight = jnp.ones((c,), jnp.float32) + 0.1 * jax.random.normal(kw, (c,), jnp.float32)
        bias = 0.1 * jax.random.normal(kb, (c,), jnp.float32)
        return x, weight, bias

    def check(y, x, w, b, tag):
        y_ref = batchnorm2d_reference(x, w, b, eps=1e-5)
        assert y.shape == x.shape, tag
        assert jnp.allclose(y, y_ref, atol=2e-5, rtol=2e-5), f"mismatch vs reference ({tag})"

    # 1) Primary small shape -> fused single-pass kernel (x read from HBM once).
    x, w, b = make_inputs((2, 4, 16, 16), 0)
    y = jax.block_until_ready(batchnorm2d_forward(x, w, b, eps=1e-5))
    check(y, x, w, b, "fused")

    # 2) Forced two-pass streaming path (aligned full-hw lane blocks).
    x, w, b = make_inputs((2, 16, 32, 32), 1)
    y = jax.block_until_ready(
        batchnorm2d_forward(x, w, b, eps=1e-5, max_fused_block_bytes=0))
    check(y, x, w, b, "streaming")

    # 3) Forced two-pass path with a ragged lane tile (hw % lane_tile != 0).
    x, w, b = make_inputs((2, 16, 20, 20), 2)
    y = jax.block_until_ready(
        batchnorm2d_forward(x, w, b, eps=1e-5,
                            max_fused_block_bytes=0, max_block_bytes=8192))
    check(y, x, w, b, "ragged")

    # TODO(synk): running_mean / running_var / num_batches_tracked buffer
    # updates are stateful training-side bookkeeping and not part of the
    # returned forward value; they are omitted from the kernels.

    print("KERNEL_OK")
</pallas_src>

<mosaic_0001>
module attributes {stable_mosaic.version = 11 : i64} {
  func.func @_bn2d_fused_kernel(%arg0: i32, %arg1: memref<2x4x256xf32, #tpu.memory_space<vmem>>, %arg2: memref<4x1xf32, #tpu.memory_space<vmem>>, %arg3: memref<4x1xf32, #tpu.memory_space<vmem>>, %arg4: memref<2x4x256xf32, #tpu.memory_space<vmem>>) attributes {dimension_semantics = [#tpu.dimension_semantics<parallel>], iteration_bounds = array<i64: 1>, scalar_prefetch = 0 : i64, scratch_operands = 0 : i64, tpu.core_type = #tpu.core_type<tc>, window_params = [{transform_indices = @transform_0, window_bounds = array<i64: 2, 4, 256>}, {transform_indices = @transform_1, window_bounds = array<i64: 4, 1>}, {transform_indices = @transform_2, window_bounds = array<i64: 4, 1>}, {transform_indices = @transform_3, window_bounds = array<i64: 2, 4, 256>}]} {
    %c0 = arith.constant 0 : index
    %c0_0 = arith.constant 0 : index
    %c0_1 = arith.constant 0 : index
    %0 = vector.load %arg1[%c0, %c0_0, %c0_1] : memref<2x4x256xf32, #tpu.memory_space<vmem>>, vector<2x4x256xf32>
    %cst = arith.constant dense<0.000000e+00> : vector<2x4xf32>
    %1 = vector.multi_reduction <add>, %0, %cst [2] : vector<2x4x256xf32> to vector<2x4xf32>
    %2 = vector.shape_cast %1 : vector<2x4xf32> to vector<2x4x1xf32>
    %cst_2 = arith.constant dense<0.000000e+00> : vector<4x1xf32>
    %3 = vector.multi_reduction <add>, %2, %cst_2 [0] : vector<2x4x1xf32> to vector<4x1xf32>
    %4 = vector.shape_cast %3 : vector<4x1xf32> to vector<1x4x1xf32>
    %cst_3 = arith.constant 0.001953125 : f32
    %5 = vector.broadcast %cst_3 : f32 to vector<1x4x1xf32>
    %6 = arith.mulf %4, %5 : vector<1x4x1xf32>
    %7 = vector.broadcast %6 : vector<1x4x1xf32> to vector<2x4x256xf32>
    %8 = arith.subf %0, %7 : vector<2x4x256xf32>
    %9 = arith.mulf %8, %8 : vector<2x4x256xf32>
    %cst_4 = arith.constant dense<0.000000e+00> : vector<2x4xf32>
    %10 = vector.multi_reduction <add>, %9, %cst_4 [2] : vector<2x4x256xf32> to vector<2x4xf32>
    %11 = vector.shape_cast %10 : vector<2x4xf32> to vector<2x4x1xf32>
    %cst_5 = arith.constant dense<0.000000e+00> : vector<4x1xf32>
    %12 = vector.multi_reduction <add>, %11, %cst_5 [0] : vector<2x4x1xf32> to vector<4x1xf32>
    %13 = vector.shape_cast %12 : vector<4x1xf32> to vector<1x4x1xf32>
    %cst_6 = arith.constant 0.00195694715 : f32
    %14 = vector.broadcast %cst_6 : f32 to vector<1x4x1xf32>
    %15 = arith.mulf %13, %14 : vector<1x4x1xf32>
    %cst_7 = arith.constant 0.000000e+00 : f32
    %16 = vector.broadcast %cst_7 : f32 to vector<1x4x1xf32>
    %17 = arith.maximumf %15, %16 : vector<1x4x1xf32>
    %cst_8 = arith.constant 9.99999974E-6 : f32
    %18 = vector.broadcast %cst_8 : f32 to vector<1x4x1xf32>
    %19 = arith.addf %17, %18 : vector<1x4x1xf32>
    %20 = math.rsqrt %19 : vector<1x4x1xf32>
    %c0_9 = arith.constant 0 : index
    %c0_10 = arith.constant 0 : index
    %21 = vector.load %arg2[%c0_9, %c0_10] : memref<4x1xf32, #tpu.memory_space<vmem>>, vector<4x1xf32>
    %22 = vector.shape_cast %21 : vector<4x1xf32> to vector<1x4x1xf32>
    %c0_11 = arith.constant 0 : index
    %c0_12 = arith.constant 0 : index
    %23 = vector.load %arg3[%c0_11, %c0_12] : memref<4x1xf32, #tpu.memory_space<vmem>>, vector<4x1xf32>
    %24 = vector.shape_cast %23 : vector<4x1xf32> to vector<1x4x1xf32>
    %25 = arith.mulf %22, %20 : vector<1x4x1xf32>
    %26 = arith.mulf %6, %25 : vector<1x4x1xf32>
    %27 = arith.subf %24, %26 : vector<1x4x1xf32>
    %28 = vector.broadcast %25 : vector<1x4x1xf32> to vector<2x4x256xf32>
    %29 = arith.mulf %0, %28 : vector<2x4x256xf32>
    %30 = vector.broadcast %27 : vector<1x4x1xf32> to vector<2x4x256xf32>
    %31 = arith.addf %29, %30 : vector<2x4x256xf32>
    %c0_13 = arith.constant 0 : index
    %c0_14 = arith.constant 0 : index
    %c0_15 = arith.constant 0 : index
    %32 = vector.load %arg4[%c0_13, %c0_14, %c0_15] : memref<2x4x256xf32, #tpu.memory_space<vmem>>, vector<2x4x256xf32>
    tpu.vector_store %arg4[%c0_13, %c0_14, %c0_15], %31 {strides = array<i32>} : memref<2x4x256xf32, #tpu.memory_space<vmem>>, vector<2x4x256xf32>,
    return
  }
  func.func @transform_0(%arg0: i32) -> (i32, i32, i32) {
    %c0_i32 = arith.constant 0 : i32
    %c0_i32_0 = arith.constant 0 : i32
    %c0_i32_1 = arith.constant 0 : i32
    return %c0_i32, %arg0, %c0_i32_0 : i32, i32, i32
  }
  func.func @transform_1(%arg0: i32) -> (i32, i32) {
    %c0_i32 = arith.constant 0 : i32
    %c0_i32_0 = arith.constant 0 : i32
    return %arg0, %c0_i32 : i32, i32
  }
  func.func @transform_2(%arg0: i32) -> (i32, i32) {
    %c0_i32 = arith.constant 0 : i32
    %c0_i32_0 = arith.constant 0 : i32
    return %arg0, %c0_i32 : i32, i32
  }
  func.func @transform_3(%arg0: i32) -> (i32, i32, i32) {
    %c0_i32 = arith.constant 0 : i32
    %c0_i32_0 = arith.constant 0 : i32
    %c0_i32_1 = arith.constant 0 : i32
    return %c0_i32, %arg0, %c0_i32_0 : i32, i32, i32
  }
}

</mosaic_0001>

<llo_original>
// kernel: tpu_custom_call.1
$region0: #{tpu_custom_call.1}
  #allocation0 [shape = 'u32[]', space=smem, size = 0x4, offset = 0x4, fixed_abs, tag = 'smem constant byte address 0x4 - core index']
  #allocation1 [shape = 'u32[144,128]{1,0:T(1,128)}', space=vmem, size = 0x12000, scoped, tag = 'internal scratch']
  %s0 = inlined_call_operand.hbm [shape: f32[2,4,256], index: 0, kind: input, shape index: {}]
  %s1 = inlined_call_operand.vmem [shape: f32[4,1], index: 1, kind: input, shape index: {}]
  %s2 = inlined_call_operand.vmem [shape: f32[4,1], index: 2, kind: input, shape index: {}]
  %s3 = inlined_call_operand.hbm [shape: f32[2,4,256], index: 3, kind: output, shape index: {}]
  %s4 = sld [smem:[#allocation0]]
  $region26: #{tpu_custom_call.1} parent=0
    _
  %s6 = ssub.s32 1, %s4
  %s7 = scalar_select 0, %s6, %s4
  $region1: #{tpu_custom_call.1} parent=0
    #allocation2 [shape = 'u8[8192]{0}', space=vmem, size = 0x2000, scoped, tag = 'input window, operand 0, single buffered']
    #allocation3 [shape = 's32[1]{0}', space=sflag, size = 0x4, scoped, tag = 'scoped memory for tpu_custom_call.1']
    #allocation4 [shape = 's32[1]{0}', space=sflag, size = 0x4, scoped, tag = 'scoped memory for tpu_custom_call.1']
    #allocation5 [shape = 'u8[8192]{0}', space=vmem, size = 0x2000, scoped, tag = 'output window, operand 0, single buffered']
    %8 = vsyncpa [#allocation3], 0
    %9 = vsyncpa [#allocation4], 0
    // Predicated region
    $region2: #{tpu_custom_call.1} parent=1 // pred_check
      _
    $region3: #{tpu_custom_call.1} parent=1 // pred_check_branch
      %11 = sbr.rel (0) target = $region5
    $region4: #{tpu_custom_call.1} parent=1 // pred_region
      %s13 = ssub.s32 256, 256
      %14 = vsyncadd [#allocation3], %s13
      %s15 = sshll.u32 [#allocation2], 4
      %s16 = int_to_ptr.vmem [resolvable:$true] %s15
      %21 = dma.hbm_to_vmem [thread:$0]  %s0, 256, %s16, [#allocation3], 128, 128, 8
    $region5: #{tpu_custom_call.1} parent=1 // pred_fallthru
      _
    // Predicated region
    $region6: #{tpu_custom_call.1} parent=1 // pred_check
      _
    $region7: #{tpu_custom_call.1} parent=1 // pred_check_branch
      %23 = sbr.rel (0) target = $region9
    $region8: #{tpu_custom_call.1} parent=1 // pred_region
      _
    $region9: #{tpu_custom_call.1} parent=1 // pred_fallthru
      _
    // Predicated region
    $region10: #{tpu_custom_call.1} parent=1 // pred_check
      _
    $region11: #{tpu_custom_call.1} parent=1 // pred_check_branch
      %25 = sbr.rel (0) target = $region13
    $region12: #{tpu_custom_call.1} parent=1 // pred_region
      _
    $region13: #{tpu_custom_call.1} parent=1 // pred_fallthru
      _
    // Predicated region
    $region14: #{tpu_custom_call.1} parent=1 // pred_check
      _
    $region15: #{tpu_custom_call.1} parent=1 // pred_check_branch
      %27 = sbr.rel (0) target = $region17
    $region16: #{tpu_custom_call.1} parent=1 // pred_region
      %28 = dma.done [#allocation3], 256
    $region17: #{tpu_custom_call.1} parent=1 // pred_fallthru
      _
    %v29 = vld [vmem:[#allocation2] sm:$0xff]
    %v30 = vld [vmem:[#allocation2 + $0x8] sm:$0xff]
    %v33 = vcombine.high %v29, %v29
    %v34 = vcombine.high %v30, %v30
    %vm37 = vcmask 1043456
    %v38 = vsel %vm37, %v29, 0.0
    %v39 = vsel %vm37, %v33, 0.0
    %v40 = vadd.f32 %v38, %v39
    %41 = vadd.xlane.f32.xlu0 %v40
    %v42 = vpop.xlane.xlu0 %41
    %v43 = vsel %vm37, %v30, 0.0
    %v44 = vsel %vm37, %v34, 0.0
    %v45 = vadd.f32 %v43, %v44
    %46 = vadd.xlane.f32.xlu0 %v45
    %v47 = vpop.xlane.xlu0 %46
    %v48 = vsel %vm37, %v42, 0.0
    %v49 = vsel %vm37, %v47, 0.0
    %v50 = vadd.f32 %v48, %v49
    %v51 = vmul.f32 %v50, 0.001953125
    %v54 = vunpack.c.l.s4 839922192
    %v55 = vunpack.c.0.s8 %v54
    %v56 = vlaneseq
    %v57 = vshrl.u32 %v56, 7
    %v58 = vsub.s32 %v55, %v57
    %v59 = vrot.slane %v51, %v58
    %v61 = vsub.f32 %v29, %v59
    %v62 = vsub.f32 %v30, %v59
    %v63 = vmul.f32 %v61, %v61
    %v64 = vmul.f32 %v62, %v62
    %v67 = vcombine.high %v63, %v63
    %v68 = vcombine.high %v64, %v64
    %v71 = vsel %vm37, %v63, 0.0
    %v72 = vsel %vm37, %v67, 0.0
    %v73 = vadd.f32 %v71, %v72
    %74 = vadd.xlane.f32.xlu0 %v73
    %v75 = vpop.xlane.xlu0 %74
    %v76 = vsel %vm37, %v64, 0.0
    %v77 = vsel %vm37, %v68, 0.0
    %v78 = vadd.f32 %v76, %v77
    %79 = vadd.xlane.f32.xlu0 %v78
    %v80 = vpop.xlane.xlu0 %79
    %v81 = vsel %vm37, %v75, 0.0
    %v82 = vsel %vm37, %v80, 0.0
    %v83 = vadd.f32 %v81, %v82
    %v84 = vmul.f32 %v83, 0.0019569471
    %v85 = vmax.f32 %v84, 0.0
    %v86 = vadd.f32 %v85, 1e-05
    %v87 = vrsqrt.pop %v86
    %v88 = vld [vmem:[%s1] sm:$0xf]
    %v89 = vld [vmem:[%s2] sm:$0xf]
    %v90 = vmul.f32 %v88, %v87
    %v91 = vmul.f32 %v51, %v90
    %v92 = vsub.f32 %v89, %v91
    %94 = vset.pattern.permute.xlu0 0
    %95 = vperm.xlu0 %94, %v90
    %v96 = vpop.permute.xlu0 %95
    %v98 = vunpack.c.l.s4 839922192
    %v99 = vunpack.c.0.s8 %v98
    %v100 = vlaneseq
    %v101 = vshrl.u32 %v100, 7
    %v102 = vsub.s32 %v99, %v101
    %v103 = vrot.slane %v96, %v102
    %v105 = vmul.f32 %v29, %v103
    %v106 = vmul.f32 %v30, %v103
    %108 = vset.pattern.permute.xlu0 0
    %109 = vperm.xlu0 %108, %v92
    %v110 = vpop.permute.xlu0 %109
    %v112 = vunpack.c.l.s4 839922192
    %v113 = vunpack.c.0.s8 %v112
    %v114 = vlaneseq
    %v115 = vshrl.u32 %v114, 7
    %v116 = vsub.s32 %v113, %v115
    %v117 = vrot.slane %v110, %v116
    %v119 = vadd.f32 %v105, %v117
    %v120 = vadd.f32 %v106, %v117
    %121 = vst [vmem:[#allocation5] sm:$0xff] %v119
    %122 = vst [vmem:[#allocation5 + $0x8] sm:$0xff] %v120
    // Predicated region
    $region18: #{tpu_custom_call.1} parent=1 // pred_check
      _
    $region19: #{tpu_custom_call.1} parent=1 // pred_check_branch
      %124 = sbr.rel (0) target = $region21
    $region20: #{tpu_custom_call.1} parent=1 // pred_region
      %s126 = ssub.s32 256, 256
      %127 = vsyncadd [#allocation4], %s126
      %s128 = sshll.u32 [#allocation5], 4
      %s129 = int_to_ptr.vmem [resolvable:$true] %s128
      %134 = dma.vmem_to_hbm [thread:$0]  %s129, 256, %s3, [#allocation4], 128, 128, 8
    $region21: #{tpu_custom_call.1} parent=1 // pred_fallthru
      _
    // Predicated region
    $region22: #{tpu_custom_call.1} parent=1 // pred_check
      _
    $region23: #{tpu_custom_call.1} parent=1 // pred_check_branch
      %136 = sbr.rel (0) target = $region25
    $region24: #{tpu_custom_call.1} parent=1 // pred_region
      %137 = dma.done [#allocation4], 256
    $region25: #{tpu_custom_call.1} parent=1 // pred_fallthru
      _
    %138 = vsyncpa [#allocation3], 1
    %139 = vsyncpa [#allocation4], 1

</llo_original>
